<compile_context>
chip_gen: v6e
topology: v6e:2x2x1
jax: 0.10.0
libtpu: 0.0.40
codegen_flags: <defaults>
</compile_context>

<pallas_src>
import numpy as np
import jax
import jax.numpy as jnp
from jax.experimental import pallas as pl
from jax.experimental.pallas import tpu as pltpu

_LANE = 128
_SUBLANE = 8


def _round_up(v, m):
    return (v + m - 1) // m * m


# ---------------------------------------------------------------------------
# Kernels
# ---------------------------------------------------------------------------
def _mlp_kernel_fused(x_ref, w1_ref, b1_ref, w2_ref, b2_ref, o_ref):
    """fc1 -> SiLU -> fc2 on one (TM, *) row tile, full-K MXU contractions."""
    x = x_ref[...].astype(jnp.bfloat16)                                # bf16 MXU operand
    h = jnp.dot(x, w1_ref[...], preferred_element_type=jnp.float32)    # MXU, K = Din_p
    h = h + b1_ref[...]                                                # f32 VPU
    h = h * jax.nn.sigmoid(h)                                          # SiLU (f32, EUP exp)
    y = jnp.dot(h.astype(jnp.bfloat16), w2_ref[...],
                preferred_element_type=jnp.float32)                    # MXU, K = H_p
    y = y + b2_ref[...]
    # TODO(synk): nn.Dropout with p > 0 in training mode is not implemented
    #             (module default p=0.0 / inference => identity).
    o_ref[...] = y.astype(o_ref.dtype)


def _mlp_kernel_htiled(x_ref, w1_ref, b1_ref, w2_ref, b2_ref, o_ref, acc_ref):
    """Same computation with the hidden dim tiled along grid axis 1
    ("arbitrary"), accumulating fc2 partial products in a VMEM scratch."""
    j = pl.program_id(1)

    @pl.when(j == 0)
    def _():
        acc_ref[...] = jnp.zeros_like(acc_ref)

    x = x_ref[...].astype(jnp.bfloat16)
    h = jnp.dot(x, w1_ref[...], preferred_element_type=jnp.float32)
    h = h + b1_ref[...]
    h = h * jax.nn.sigmoid(h)
    acc_ref[...] += jnp.dot(h.astype(jnp.bfloat16), w2_ref[...],
                            preferred_element_type=jnp.float32)

    @pl.when(j == pl.num_programs(1) - 1)
    def _():
        o_ref[...] = (acc_ref[...] + b2_ref[...]).astype(o_ref.dtype)


# ---------------------------------------------------------------------------
# One-time parameter preparation (pad once, cast weights to bf16)
# ---------------------------------------------------------------------------
def prepare_mlp_params(w1, b1, w2, b2):
    """w1:(Din,H)  b1:(H,)  w2:(H,Dout)  b2:(Dout,)   (PyTorch weight.T / bias)."""
    Din, H = w1.shape
    Dout = w2.shape[1]
    Din_p, H_p, Dout_p = (_round_up(d, _LANE) for d in (Din, H, Dout))
    w1p = jnp.pad(w1, ((0, Din_p - Din), (0, H_p - H))).astype(jnp.bfloat16)
    b1p = jnp.pad(b1, (0, H_p - H)).astype(jnp.float32).reshape(1, H_p)
    w2p = jnp.pad(w2, ((0, H_p - H), (0, Dout_p - Dout))).astype(jnp.bfloat16)
    b2p = jnp.pad(b2, (0, Dout_p - Dout)).astype(jnp.float32).reshape(1, Dout_p)
    return dict(w1=w1p, b1=b1p, w2=w2p, b2=b2p,
                dims=(Din, H, Dout), padded=(Din_p, H_p, Dout_p))


def _choose_tm(M):
    """Pick row tile minimizing (padded-row waste + per-step overhead) while
    preferring >= 2 grid steps (so v7x can shard the 'parallel' axis)."""
    best_tm, best_score = _SUBLANE, None
    for tm in (512, 256, 128, 64, 32, 16, 8):
        m_p = _round_up(max(M, 1), tm)
        steps = m_p // tm
        score = (m_p - M) + 16 * steps + (64 if steps < 2 else 0)
        if best_score is None or score < best_score:
            best_score, best_tm = score, tm
    return best_tm


# ---------------------------------------------------------------------------
# Forward
# ---------------------------------------------------------------------------
def mlp_forward(x, params, *, force_hidden_tile=None):
    Din, H, Dout = params["dims"]
    Din_p, H_p, Dout_p = params["padded"]
    w1p, b1p, w2p, b2p = params["w1"], params["b1"], params["w2"], params["b2"]

    lead = x.shape[:-1]
    assert x.shape[-1] == Din
    M = int(np.prod(lead)) if lead else 1

    TM = _choose_tm(M)
    M_p = _round_up(M, TM)

    x2 = x.reshape(M, Din)
    if (M_p, Din_p) != (M, Din):           # skip the pad when already aligned
        x2 = jnp.pad(x2, ((0, M_p - M), (0, Din_p - Din)))
    x_bytes = x2.dtype.itemsize
    o_bytes = jnp.dtype(x.dtype).itemsize
    grid_m = M_p // TM

    # Resident footprint estimate (weights single-buffered, x/out double-buffered,
    # + f32 temporaries for h and y).
    weight_bytes = (Din_p * H_p + H_p * Dout_p) * 2 + (H_p + Dout_p) * 4
    io_bytes = 2 * TM * Din_p * x_bytes + 2 * TM * Dout_p * o_bytes
    tmp_bytes = TM * H_p * 4 + TM * Dout_p * 4
    fused_need = weight_bytes + io_bytes + tmp_bytes

    use_htile = (force_hidden_tile is not None) or (fused_need > (24 << 20))

    cost = pl.CostEstimate(
        flops=2 * M_p * (Din_p * H_p + H_p * Dout_p),
        transcendentals=M_p * H_p,
        bytes_accessed=(M_p * Din_p * x_bytes
                        + (Din_p * H_p + H_p * Dout_p) * 2
                        + M_p * Dout_p * o_bytes),
    )

    if not use_htile:
        vmem_limit = min(max(int(1.25 * fused_need) + (2 << 20), 32 << 20), 64 << 20)
        out = pl.pallas_call(
            _mlp_kernel_fused,
            out_shape=jax.ShapeDtypeStruct((M_p, Dout_p), x.dtype),
            grid_spec=pltpu.PrefetchScalarGridSpec(
                num_scalar_prefetch=0,
                grid=(grid_m,),
                in_specs=[
                    pl.BlockSpec((TM, Din_p), lambda i: (i, 0)),          # x row tile
                    # constant-index weight/bias blocks: single-buffered residents
                    pl.BlockSpec((Din_p, H_p), lambda i: (0, 0),
                                 pipeline_mode=pl.Buffered(1)),
                    pl.BlockSpec((1, H_p), lambda i: (0, 0),
                                 pipeline_mode=pl.Buffered(1)),
                    pl.BlockSpec((H_p, Dout_p), lambda i: (0, 0),
                                 pipeline_mode=pl.Buffered(1)),
                    pl.BlockSpec((1, Dout_p), lambda i: (0, 0),
                                 pipeline_mode=pl.Buffered(1)),
                ],
                out_specs=pl.BlockSpec((TM, Dout_p), lambda i: (i, 0)),
            ),
            compiler_params=pltpu.CompilerParams(
                dimension_semantics=("parallel",),
                vmem_limit_bytes=vmem_limit,
            ),
            cost_estimate=cost,
        )(x2, w1p, b1p, w2p, b2p)
    else:
        # Hidden-dim-tiled fallback (v7x: 64 MiB/TC with per-core weight copy).
        TH = force_hidden_tile if force_hidden_tile is not None else 512
        TH = min(_round_up(TH, _LANE), H_p)
        H_pp = _round_up(H_p, TH)
        if H_pp != H_p:
            w1p = jnp.pad(w1p, ((0, 0), (0, H_pp - H_p)))
            b1p = jnp.pad(b1p, ((0, 0), (0, H_pp - H_p)))
            w2p = jnp.pad(w2p, ((0, H_pp - H_p), (0, 0)))
        grid_h = H_pp // TH
        htile_need = (2 * (Din_p * TH + TH * Dout_p) * 2       # double-buffered weight tiles
                      + io_bytes + TM * Dout_p * 4              # acc scratch
                      + TM * TH * 4 + (H_pp + Dout_p) * 4)
        vmem_limit = min(max(int(1.25 * htile_need) + (2 << 20), 32 << 20), 64 << 20)
        out = pl.pallas_call(
            _mlp_kernel_htiled,
            out_shape=jax.ShapeDtypeStruct((M_p, Dout_p), x.dtype),
            grid_spec=pltpu.PrefetchScalarGridSpec(
                num_scalar_prefetch=0,
                grid=(grid_m, grid_h),
                in_specs=[
                    pl.BlockSpec((TM, Din_p), lambda i, j: (i, 0)),
                    pl.BlockSpec((Din_p, TH), lambda i, j: (0, j)),
                    pl.BlockSpec((1, TH), lambda i, j: (0, j)),
                    pl.BlockSpec((TH, Dout_p), lambda i, j: (j, 0)),
                    pl.BlockSpec((1, Dout_p), lambda i, j: (0, 0)),
                ],
                out_specs=pl.BlockSpec((TM, Dout_p), lambda i, j: (i, 0)),
                scratch_shapes=[pltpu.VMEM((TM, Dout_p), jnp.float32)],
            ),
            compiler_params=pltpu.CompilerParams(
                dimension_semantics=("parallel", "arbitrary"),
                vmem_limit_bytes=vmem_limit,
            ),
            cost_estimate=cost,
        )(x2, w1p, b1p, w2p, b2p)

    return out[:M, :Dout].reshape(*lead, Dout)


def mlp_forward_raw(x, w1, b1, w2, b2, **kw):
    return mlp_forward(x, prepare_mlp_params(w1, b1, w2, b2), **kw)


# ---------------------------------------------------------------------------
# Pure-JAX reference (accurate f32 baseline)
# ---------------------------------------------------------------------------
def mlp_ref(x, w1, b1, w2, b2):
    with jax.default_matmul_precision("float32"):
        h = x @ w1 + b1
        h = jax.nn.silu(h)
        return h @ w2 + b2


# ---------------------------------------------------------------------------
if __name__ == "__main__":
    def make_case(key, B, S, Din, Hdim, Dout):
        kx, k1, kb1, k2, kb2 = jax.random.split(key, 5)
        x = jax.random.normal(kx, (B, S, Din), jnp.float32)
        w1 = jax.random.normal(k1, (Din, Hdim), jnp.float32) / np.sqrt(Din)
        b1 = 0.1 * jax.random.normal(kb1, (Hdim,), jnp.float32)
        w2 = jax.random.normal(k2, (Hdim, Dout), jnp.float32) / np.sqrt(Hdim)
        b2 = 0.1 * jax.random.normal(kb2, (Dout,), jnp.float32)
        return x, w1, b1, w2, b2

    root = jax.random.PRNGKey(0)
    k_a, k_b = jax.random.split(root, 2)

    # Case 1: lane-aligned dims, fused (fully resident weights) path.
    x, w1, b1, w2, b2 = make_case(k_a, B=2, S=8, Din=128, Hdim=256, Dout=128)
    params = prepare_mlp_params(w1, b1, w2, b2)
    out = jax.block_until_ready(mlp_forward(x, params))
    ref = jax.block_until_ready(mlp_ref(x, w1, b1, w2, b2))
    assert out.shape == ref.shape, (out.shape, ref.shape)
    np.testing.assert_allclose(np.asarray(out), np.asarray(ref), rtol=5e-2, atol=5e-2)

    # Case 2: same model, hidden-dim-tiled fallback path forced (TH=128 -> 2 steps).
    out2 = jax.block_until_ready(mlp_forward(x, params, force_hidden_tile=128))
    np.testing.assert_allclose(np.asarray(out2), np.asarray(ref), rtol=5e-2, atol=5e-2)

    # Case 3: unaligned feature dims + unaligned row count (exercises padding).
    x3, w13, b13, w23, b23 = make_case(k_b, B=2, S=5, Din=40, Hdim=72, Dout=24)
    out3 = jax.block_until_ready(mlp_forward_raw(x3, w13, b13, w23, b23))
    ref3 = jax.block_until_ready(mlp_ref(x3, w13, b13, w23, b23))
    assert out3.shape == ref3.shape, (out3.shape, ref3.shape)
    np.testing.assert_allclose(np.asarray(out3), np.asarray(ref3), rtol=5e-2, atol=5e-2)

    print("KERNEL_OK")
</pallas_src>

<mosaic_0001>
module attributes {stable_mosaic.version = 11 : i64} {
  func.func @_mlp_kernel_fused(%arg0: i32, %arg1: memref<8x128xf32, #tpu.memory_space<vmem>>, %arg2: memref<128x256xbf16, #tpu.memory_space<vmem>>, %arg3: memref<1x256xf32, #tpu.memory_space<vmem>>, %arg4: memref<256x128xbf16, #tpu.memory_space<vmem>>, %arg5: memref<1x128xf32, #tpu.memory_space<vmem>>, %arg6: memref<8x128xf32, #tpu.memory_space<vmem>>) attributes {dimension_semantics = [#tpu.dimension_semantics<parallel>], iteration_bounds = array<i64: 2>, scalar_prefetch = 0 : i64, scratch_operands = 0 : i64, tpu.core_type = #tpu.core_type<tc>, window_params = [{transform_indices = @transform_0, window_bounds = array<i64: 8, 128>}, {pipeline_mode = #tpu.pipeline_mode<synchronous>, transform_indices = @transform_1, window_bounds = array<i64: 128, 256>}, {pipeline_mode = #tpu.pipeline_mode<synchronous>, transform_indices = @transform_2, window_bounds = array<i64: 1, 256>}, {pipeline_mode = #tpu.pipeline_mode<synchronous>, transform_indices = @transform_3, window_bounds = array<i64: 256, 128>}, {pipeline_mode = #tpu.pipeline_mode<synchronous>, transform_indices = @transform_4, window_bounds = array<i64: 1, 128>}, {transform_indices = @transform_5, window_bounds = array<i64: 8, 128>}]} {
    %c0 = arith.constant 0 : index
    %c0_0 = arith.constant 0 : index
    %0 = vector.load %arg1[%c0, %c0_0] : memref<8x128xf32, #tpu.memory_space<vmem>>, vector<8x128xf32>
    %1 = arith.truncf %0 : vector<8x128xf32> to vector<8x128xbf16>
    %c0_1 = arith.constant 0 : index
    %c0_2 = arith.constant 0 : index
    %2 = vector.load %arg2[%c0_1, %c0_2] : memref<128x256xbf16, #tpu.memory_space<vmem>>, vector<128x256xbf16>
    %cst = arith.constant dense<0.000000e+00> : vector<8x256xf32>
    %3 = tpu.matmul %1, %2, %cst {dimension_numbers = #tpu.dot_dimension_numbers<[1], [0], [0], [1], [0, 0, 1, 1], [], []>} : vector<8x128xbf16>, vector<128x256xbf16>, vector<8x256xf32> -> vector<8x256xf32>
    %c0_3 = arith.constant 0 : index
    %c0_4 = arith.constant 0 : index
    %4 = vector.load %arg3[%c0_3, %c0_4] : memref<1x256xf32, #tpu.memory_space<vmem>>, vector<1x256xf32>
    %5 = vector.broadcast %4 : vector<1x256xf32> to vector<8x256xf32>
    %6 = arith.addf %3, %5 : vector<8x256xf32>
    %7 = arith.negf %6 : vector<8x256xf32>
    %8 = math.exp %7 : vector<8x256xf32>
    %cst_5 = arith.constant 1.000000e+00 : f32
    %9 = vector.broadcast %cst_5 : f32 to vector<8x256xf32>
    %10 = arith.addf %9, %8 : vector<8x256xf32>
    %11 = arith.divf %9, %10 : vector<8x256xf32>
    %12 = arith.mulf %6, %11 : vector<8x256xf32>
    %13 = arith.truncf %12 : vector<8x256xf32> to vector<8x256xbf16>
    %c0_6 = arith.constant 0 : index
    %c0_7 = arith.constant 0 : index
    %14 = vector.load %arg4[%c0_6, %c0_7] : memref<256x128xbf16, #tpu.memory_space<vmem>>, vector<256x128xbf16>
    %cst_8 = arith.constant dense<0.000000e+00> : vector<8x128xf32>
    %15 = tpu.matmul %13, %14, %cst_8 {dimension_numbers = #tpu.dot_dimension_numbers<[1], [0], [0], [1], [0, 0, 1, 1], [], []>} : vector<8x256xbf16>, vector<256x128xbf16>, vector<8x128xf32> -> vector<8x128xf32>
    %c0_9 = arith.constant 0 : index
    %c0_10 = arith.constant 0 : index
    %16 = vector.load %arg5[%c0_9, %c0_10] : memref<1x128xf32, #tpu.memory_space<vmem>>, vector<1x128xf32>
    %17 = vector.broadcast %16 : vector<1x128xf32> to vector<8x128xf32>
    %18 = arith.addf %15, %17 : vector<8x128xf32>
    %c0_11 = arith.constant 0 : index
    %c0_12 = arith.constant 0 : index
    %19 = vector.load %arg6[%c0_11, %c0_12] : memref<8x128xf32, #tpu.memory_space<vmem>>, vector<8x128xf32>
    tpu.vector_store %arg6[%c0_11, %c0_12], %18 {strides = array<i32>} : memref<8x128xf32, #tpu.memory_space<vmem>>, vector<8x128xf32>,
    return
  }
  func.func @transform_0(%arg0: i32) -> (i32, i32) {
    %c0_i32 = arith.constant 0 : i32
    %c0_i32_0 = arith.constant 0 : i32
    return %arg0, %c0_i32 : i32, i32
  }
  func.func @transform_1(%arg0: i32) -> (i32, i32) {
    %c0_i32 = arith.constant 0 : i32
    %c0_i32_0 = arith.constant 0 : i32
    %c0_i32_1 = arith.constant 0 : i32
    return %c0_i32, %c0_i32_0 : i32, i32
  }
  func.func @transform_2(%arg0: i32) -> (i32, i32) {
    %c0_i32 = arith.constant 0 : i32
    %c0_i32_0 = arith.constant 0 : i32
    %c0_i32_1 = arith.constant 0 : i32
    return %c0_i32, %c0_i32_0 : i32, i32
  }
  func.func @transform_3(%arg0: i32) -> (i32, i32) {
    %c0_i32 = arith.constant 0 : i32
    %c0_i32_0 = arith.constant 0 : i32
    %c0_i32_1 = arith.constant 0 : i32
    return %c0_i32, %c0_i32_0 : i32, i32
  }
  func.func @transform_4(%arg0: i32) -> (i32, i32) {
    %c0_i32 = arith.constant 0 : i32
    %c0_i32_0 = arith.constant 0 : i32
    %c0_i32_1 = arith.constant 0 : i32
    return %c0_i32, %c0_i32_0 : i32, i32
  }
  func.func @transform_5(%arg0: i32) -> (i32, i32) {
    %c0_i32 = arith.constant 0 : i32
    %c0_i32_0 = arith.constant 0 : i32
    return %arg0, %c0_i32 : i32, i32
  }
}

</mosaic_0001>

<llo_original>
// kernel: tpu_custom_call.1
$region0: #{tpu_custom_call.1}
  #allocation0 [shape = 'u32[]', space=smem, size = 0x4, offset = 0x4, fixed_abs, tag = 'smem constant byte address 0x4 - core index']
  #allocation1 [shape = 'u32[144,128]{1,0:T(1,128)}', space=vmem, size = 0x12000, scoped, tag = 'internal scratch']
  %s0 = inlined_call_operand.hbm [shape: f32[16,128], index: 0, kind: input, shape index: {}]
  %s1 = inlined_call_operand.hbm [shape: bf16[128,256], index: 1, kind: input, shape index: {}]
  %s2 = inlined_call_operand.vmem [shape: f32[1,256], index: 2, kind: input, shape index: {}]
  %s3 = inlined_call_operand.hbm [shape: bf16[256,128], index: 3, kind: input, shape index: {}]
  %s4 = inlined_call_operand.vmem [shape: f32[1,128], index: 4, kind: input, shape index: {}]
  %s5 = inlined_call_operand.hbm [shape: f32[16,128], index: 5, kind: output, shape index: {}]
  %s6 = sld [smem:[#allocation0]]
  $region65: #{tpu_custom_call.1} parent=0
    _
  %s8 = ssub.s32 1, %s6
  %s9 = scalar_select 0, %s8, %s6
  $region1: #{tpu_custom_call.1} parent=0
    #allocation2 [shape = 'u8[8192]{0}', space=vmem, size = 0x2000, scoped, tag = 'input window, operand 0']
    #allocation3 [shape = 's32[2]{0}', space=sflag, size = 0x8, scoped, tag = 'scoped memory for tpu_custom_call.1']
    #allocation4 [shape = 's32[2]{0}', space=sflag, size = 0x8, scoped, tag = 'scoped memory for tpu_custom_call.1']
    #allocation5 [shape = 'u8[65536]{0}', space=vmem, size = 0x10000, scoped, tag = 'input window, operand 1, single buffered']
    #allocation6 [shape = 's32[1]{0}', space=sflag, size = 0x4, scoped, tag = 'scoped memory for tpu_custom_call.1']
    #allocation7 [shape = 'u8[65536]{0}', space=vmem, size = 0x10000, scoped, tag = 'input window, operand 3, single buffered']
    #allocation8 [shape = 'u8[8192]{0}', space=vmem, size = 0x2000, scoped, tag = 'output window, operand 0']
    %10 = vsyncpa [#allocation3], 0
    %s11 = scalar_lea.sflag [#allocation3], 1
    %12 = vsyncpa %s11, 0
    %13 = vsyncpa [#allocation6], 0
    %14 = vsyncpa [#allocation4], 0
    %s15 = scalar_lea.sflag [#allocation4], 1
    %16 = vsyncpa %s15, 0
    loop: start=0, step=1, limit=4
    $region2: #{tpu_custom_call.1} parent=1 // loop_pre_header
      _
    $region3: #{tpu_custom_call.1} parent=1 // loop_header
      %s18 = sphi 0, %s22
      %p19 = scmp.ge.s32.totalorder %s18, 4
      %s28 = sphi 0, %s30
      %s31 = sphi 0, %s28
      %s32 = sphi 0, %s31
      %s48 = sphi 0, %s32
      %s52 = sphi 0, %s52
      %s54 = sphi 0, %s52
      %s55 = sphi 0, %s54
      %s69 = sphi 0, %s55
      %s73 = sphi 0, %s73
      %s75 = sphi 0, %s73
      %s76 = sphi 0, %s75
      %s90 = sphi 0, %s76
      %s94 = sphi 0, %s94
      %s96 = sphi 0, %s94
      %s97 = sphi 0, %s96
      %s111 = sphi 0, %s97
      %s115 = sphi 0, %s115
      %s117 = sphi 0, %s115
      %s118 = sphi 0, %s117
      %s132 = sphi 0, %s118
      %s138 = sphi 0, %s140
      %s141 = sphi 0, %s138
      %s142 = sphi 0, %s141
      %s158 = sphi 0, %s142
    $region4: #{tpu_custom_call.1} parent=1 // loop_header_branch
      %21 = sbr.rel (%p19) target = $region8
    $region5: #{tpu_custom_call.1} parent=1 // loop_body
      %s23 = ssub.s32 %s18, 1
      %s24 = ssub.s32 %s18, 2
      %s25 = sadd.s32 %s18, 1
      %s26 = ssub.s32 %s18, %s25
      %p27 = scmp.eq.s32.totalorder %s26, 0
      %s29 = sadd.s32 %s28, 1
      %s30 = scalar_select %p27, %s28, %s29
      %p33 = pneg %p27
      %p34 = scmp.eq.s32.totalorder %s18, 1
      %p35 = por %p33, %p34
      %p36 = scmp.ne.s32.totalorder %s28, %s31
      %p37 = scmp.eq.s32.totalorder %s18, 0
      %p38 = por %p36, %p37
      %p39 = scmp.ne.s32.totalorder %s28, %s31
      %p40 = scmp.eq.s32.totalorder %s23, 1
      %p41 = por %p39, %p40
      %p42 = scmp.ne.s32.totalorder %s31, %s32
      %p43 = scmp.eq.s32.totalorder %s23, 0
      %p44 = por %p42, %p43
      %p45 = scmp.ne.s32.totalorder %s31, %s32
      %p46 = scmp.eq.s32.totalorder %s24, 1
      %p47 = por %p45, %p46
      %p49 = scmp.ne.s32.totalorder %s32, %s48
      %p50 = scmp.eq.s32.totalorder %s24, 0
      %p51 = por %p49, %p50
      %s53 = sadd.s32 %s52, 1
      %p56 = scmp.eq.s32.totalorder %s18, 1
      %p57 = scmp.ne.s32.totalorder %s52, %s54
      %p58 = scmp.eq.s32.totalorder %s18, 0
      %p59 = por %p57, %p58
      %p60 = scmp.ne.s32.totalorder %s52, %s54
      %p61 = scmp.eq.s32.totalorder %s23, 1
      %p62 = por %p60, %p61
      %p63 = scmp.ne.s32.totalorder %s54, %s55
      %p64 = scmp.eq.s32.totalorder %s23, 0
      %p65 = por %p63, %p64
      %p66 = scmp.ne.s32.totalorder %s54, %s55
      %p67 = scmp.eq.s32.totalorder %s24, 1
      %p68 = por %p66, %p67
      %p70 = scmp.ne.s32.totalorder %s55, %s69
      %p71 = scmp.eq.s32.totalorder %s24, 0
      %p72 = por %p70, %p71
      %s74 = sadd.s32 %s73, 1
      %p77 = scmp.eq.s32.totalorder %s18, 1
      %p78 = scmp.ne.s32.totalorder %s73, %s75
      %p79 = scmp.eq.s32.totalorder %s18, 0
      %p80 = por %p78, %p79
      %p81 = scmp.ne.s32.totalorder %s73, %s75
      %p82 = scmp.eq.s32.totalorder %s23, 1
      %p83 = por %p81, %p82
      %p84 = scmp.ne.s32.totalorder %s75, %s76
      %p85 = scmp.eq.s32.totalorder %s23, 0
      %p86 = por %p84, %p85
      %p87 = scmp.ne.s32.totalorder %s75, %s76
      %p88 = scmp.eq.s32.totalorder %s24, 1
      %p89 = por %p87, %p88
      %p91 = scmp.ne.s32.totalorder %s76, %s90
      %p92 = scmp.eq.s32.totalorder %s24, 0
      %p93 = por %p91, %p92
      %s95 = sadd.s32 %s94, 1
      %p98 = scmp.eq.s32.totalorder %s18, 1
      %p99 = scmp.ne.s32.totalorder %s94, %s96
      %p100 = scmp.eq.s32.totalorder %s18, 0
      %p101 = por %p99, %p100
      %p102 = scmp.ne.s32.totalorder %s94, %s96
      %p103 = scmp.eq.s32.totalorder %s23, 1
      %p104 = por %p102, %p103
      %p105 = scmp.ne.s32.totalorder %s96, %s97
      %p106 = scmp.eq.s32.totalorder %s23, 0
      %p107 = por %p105, %p106
      %p108 = scmp.ne.s32.totalorder %s96, %s97
      %p109 = scmp.eq.s32.totalorder %s24, 1
      %p110 = por %p108, %p109
      %p112 = scmp.ne.s32.totalorder %s97, %s111
      %p113 = scmp.eq.s32.totalorder %s24, 0
      %p114 = por %p112, %p113
      %s116 = sadd.s32 %s115, 1
      %p119 = scmp.eq.s32.totalorder %s18, 1
      %p120 = scmp.ne.s32.totalorder %s115, %s117
      %p121 = scmp.eq.s32.totalorder %s18, 0
      %p122 = por %p120, %p121
      %p123 = scmp.ne.s32.totalorder %s115, %s117
      %p124 = scmp.eq.s32.totalorder %s23, 1
      %p125 = por %p123, %p124
      %p126 = scmp.ne.s32.totalorder %s117, %s118
      %p127 = scmp.eq.s32.totalorder %s23, 0
      %p128 = por %p126, %p127
      %p129 = scmp.ne.s32.totalorder %s117, %s118
      %p130 = scmp.eq.s32.totalorder %s24, 1
      %p131 = por %p129, %p130
      %p133 = scmp.ne.s32.totalorder %s118, %s132
      %p134 = scmp.eq.s32.totalorder %s24, 0
      %p135 = por %p133, %p134
      %s136 = ssub.s32 %s18, %s25
      %p137 = scmp.eq.s32.totalorder %s136, 0
      %s139 = sadd.s32 %s138, 1
      %s140 = scalar_select %p137, %s138, %s139
      %p143 = pneg %p137
      %p144 = scmp.eq.s32.totalorder %s18, 1
      %p145 = por %p143, %p144
      %p146 = scmp.ne.s32.totalorder %s138, %s141
      %p147 = scmp.eq.s32.totalorder %s18, 0
      %p148 = por %p146, %p147
      %p149 = scmp.ne.s32.totalorder %s138, %s141
      %p150 = scmp.eq.s32.totalorder %s23, 1
      %p151 = por %p149, %p150
      %p152 = scmp.ne.s32.totalorder %s141, %s142
      %p153 = scmp.eq.s32.totalorder %s23, 0
      %p154 = por %p152, %p153
      %p155 = scmp.ne.s32.totalorder %s141, %s142
      %p156 = scmp.eq.s32.totalorder %s24, 1
      %p157 = por %p155, %p156
      %p159 = scmp.ne.s32.totalorder %s142, %s158
      %p160 = scmp.eq.s32.totalorder %s24, 0
      %p161 = por %p159, %p160
      %p162 = scmp.le.s32.totalorder 1, %s18
      %p163 = scmp.lt.s32.totalorder %s18, 3
      %p164 = pnand %p162, %p163
      %p165 = pneg %p164
      // Predicated region
      $region9: #{tpu_custom_call.1} parent=5 // pred_check
        _
      $region10: #{tpu_custom_call.1} parent=5 // pred_check_branch
        %167 = sbr.rel (%p164) target = $region12
      $region11: #{tpu_custom_call.1} parent=5 // pred_region
        %s168 = ssub.s32 %s18, 1
        // Predicated region
        $region13: #{tpu_custom_call.1} parent=11 // pred_check
          %p169 = pneg %p65
        $region14: #{tpu_custom_call.1} parent=11 // pred_check_branch
          %171 = sbr.rel (%p169) target = $region16
        $region15: #{tpu_custom_call.1} parent=11 // pred_region
          %s173 = ssub.s32 2048, 2048
          %174 = vsyncadd [#allocation6], %s173
          %s175 = sshll.u32 [#allocation5], 4
          %s176 = int_to_ptr.vmem [resolvable:$true] %s175
          %181 = dma.hbm_to_vmem [thread:$0]  %s1, 2048, %s176, [#allocation6], 128, 128, 8
        $region16: #{tpu_custom_call.1} parent=11 // pred_fallthru
          _
        // Predicated region
        $region17: #{tpu_custom_call.1} parent=11 // pred_check
          %p182 = pneg %p86
        $region18: #{tpu_custom_call.1} parent=11 // pred_check_branch
          %184 = sbr.rel (%p182) target = $region20
        $region19: #{tpu_custom_call.1} parent=11 // pred_region
          _
        $region20: #{tpu_custom_call.1} parent=11 // pred_fallthru
          _
        // Predicated region
        $region21: #{tpu_custom_call.1} parent=11 // pred_check
          %p185 = pneg %p107
        $region22: #{tpu_custom_call.1} parent=11 // pred_check_branch
          %187 = sbr.rel (%p185) target = $region24
        $region23: #{tpu_custom_call.1} parent=11 // pred_region
          %s189 = ssub.s32 2048, 2048
          %190 = vsyncadd [#allocation6], %s189
          %s191 = sshll.u32 [#allocation7], 4
          %s192 = int_to_ptr.vmem [resolvable:$true] %s191
          %197 = dma.hbm_to_vmem [thread:$0]  %s3, 2048, %s192, [#allocation6], 64, 64, 4
        $region24: #{tpu_custom_call.1} parent=11 // pred_fallthru
          _
        // Predicated region
        $region25: #{tpu_custom_call.1} parent=11 // pred_check
          %p198 = pneg %p128
        $region26: #{tpu_custom_call.1} parent=11 // pred_check_branch
          %200 = sbr.rel (%p198) target = $region28
        $region27: #{tpu_custom_call.1} parent=11 // pred_region
          _
        $region28: #{tpu_custom_call.1} parent=11 // pred_fallthru
          _
      $region12: #{tpu_custom_call.1} parent=5 // pred_fallthru
        _
      %p201 = scmp.lt.s32.totalorder %s18, 2
      // Predicated region
      $region29: #{tpu_custom_call.1} parent=5 // pred_check
        %p202 = pneg %p201
      $region30: #{tpu_custom_call.1} parent=5 // pred_check_branch
        %204 = sbr.rel (%p202) target = $region32
      $region31: #{tpu_custom_call.1} parent=5 // pred_region
        // Predicated region
        $region33: #{tpu_custom_call.1} parent=31 // pred_check
          %p205 = pneg %p38
        $region34: #{tpu_custom_call.1} parent=31 // pred_check_branch
          %207 = sbr.rel (%p205) target = $region36
        $region35: #{tpu_custom_call.1} parent=31 // pred_region
          %s208 = sand.u32 %s28, 1
          %s209 = scalar_lea.sflag [#allocation3], %s208
          %s210 = sand.u32 %s28, 1
          %s211 = smul.addr %s210, 8
          %s212 = scalar_lea.vmem [#allocation2], %s211
          %s214 = ssub.s32 128, 128
          %215 = vsyncadd %s209, %s214
          %s216 = smul.addr %s18, 128
          %s217 = scalar_lea.hbm %s0, %s216
          %s219 = sshll.u32 %s212, 4
          %s220 = int_to_ptr.vmem [resolvable:$true] %s219
          %222 = dma.hbm_to_vmem [thread:$0]  %s217, 128, %s220, %s209
        $region36: #{tpu_custom_call.1} parent=31 // pred_fallthru
          _
      $region32: #{tpu_custom_call.1} parent=5 // pred_fallthru
        _
      %p223 = scmp.le.s32.totalorder 1, %s18
      %p224 = scmp.lt.s32.totalorder %s18, 3
      %p225 = pnand %p223, %p224
      %p226 = pneg %p225
      // Predicated region
      $region37: #{tpu_custom_call.1} parent=5 // pred_check
        _
      $region38: #{tpu_custom_call.1} parent=5 // pred_check_branch
        %228 = sbr.rel (%p225) target = $region40
      $region39: #{tpu_custom_call.1} parent=5 // pred_region
        %s229 = ssub.s32 %s18, 1
        %s230 = sand.u32 %s31, 1
        %s231 = scalar_lea.sflag [#allocation3], %s230
        %s232 = sand.u32 %s31, 1
        %s233 = smul.addr %s232, 8
        %s234 = scalar_lea.vmem [#allocation2], %s233
        // Predicated region
        $region41: #{tpu_custom_call.1} parent=39 // pred_check
          %p235 = pneg %p44
        $region42: #{tpu_custom_call.1} parent=39 // pred_check_branch
          %237 = sbr.rel (%p235) target = $region44
        $region43: #{tpu_custom_call.1} parent=39 // pred_region
          %238 = dma.done %s231, 128
        $region44: #{tpu_custom_call.1} parent=39 // pred_fallthru
          _
        // Predicated region
        $region45: #{tpu_custom_call.1} parent=39 // pred_check
          %p239 = pneg %p65
        $region46: #{tpu_custom_call.1} parent=39 // pred_check_branch
          %241 = sbr.rel (%p239) target = $region48
        $region47: #{tpu_custom_call.1} parent=39 // pred_region
          %242 = dma.done [#allocation6], 2048
        $region48: #{tpu_custom_call.1} parent=39 // pred_fallthru
          _
        // Predicated region
        $region49: #{tpu_custom_call.1} parent=39 // pred_check
          %p243 = pneg %p107
        $region50: #{tpu_custom_call.1} parent=39 // pred_check_branch
          %245 = sbr.rel (%p243) target = $region52
        $region51: #{tpu_custom_call.1} parent=39 // pred_region
          %246 = dma.done [#allocation6], 2048
        $region52: #{tpu_custom_call.1} parent=39 // pred_fallthru
          _
        %s247 = sand.u32 %s31, 1
        %s248 = scalar_lea.sflag [#allocation3], %s247
        %s249 = sand.u32 %s31, 1
        %s250 = smul.addr %s249, 8
        %s251 = scalar_lea.vmem [#allocation2], %s250
        %p252 = pneg %p44
        %p253 = pneg %p41
        %p254 = pneg %p65
        %p255 = pneg %p62
        %p256 = pneg %p86
        %p257 = pneg %p83
        %p258 = pneg %p107
        %p259 = pneg %p104
        %p260 = pneg %p128
        %p261 = pneg %p125
        %p262 = pneg %p154
        %p263 = pneg %p151
        %s264 = sand.u32 %s141, 1
        %s265 = scalar_lea.sflag [#allocation4], %s264
        %s266 = sand.u32 %s141, 1
        %s267 = smul.addr %s266, 8
        %s268 = scalar_lea.vmem [#allocation8], %s267
        %v270 = vld [vmem:[%s234] sm:$0xff]
        %v271 = vpack.c.bf16 %v270, %v270
        %v272 = vld [vmem:[#allocation5] sm:$0xff]
        %v273 = vld [vmem:[#allocation5 + $0x8] sm:$0xff]
        %v274 = vld [vmem:[#allocation5 + $0x10] sm:$0xff]
        %v275 = vld [vmem:[#allocation5 + $0x18] sm:$0xff]
        %v276 = vld [vmem:[#allocation5 + $0x20] sm:$0xff]
        %v277 = vld [vmem:[#allocation5 + $0x28] sm:$0xff]
        %v278 = vld [vmem:[#allocation5 + $0x30] sm:$0xff]
        %v279 = vld [vmem:[#allocation5 + $0x38] sm:$0xff]
        %v280 = vld [vmem:[#allocation5 + $0x40] sm:$0xff]
        %v281 = vld [vmem:[#allocation5 + $0x48] sm:$0xff]
        %v282 = vld [vmem:[#allocation5 + $0x50] sm:$0xff]
        %v283 = vld [vmem:[#allocation5 + $0x58] sm:$0xff]
        %v284 = vld [vmem:[#allocation5 + $0x60] sm:$0xff]
        %v285 = vld [vmem:[#allocation5 + $0x68] sm:$0xff]
        %v286 = vld [vmem:[#allocation5 + $0x70] sm:$0xff]
        %v287 = vld [vmem:[#allocation5 + $0x78] sm:$0xff]
        %v288 = vld [vmem:[%s2] sm:$0x3]
        %v290 = vlaneseq
        %v291 = vshrl.u32 %v290, 7
        %v292 = vsub.s32 0, %v291
        %v293 = vrot.slane %v288, %v292
        %v294 = vlaneseq
        %v295 = vshrl.u32 %v294, 7
        %v296 = vsub.s32 1, %v295
        %v297 = vrot.slane %v288, %v296
        %v316 = vunpack.c.l.b16 %v272
        %v317 = vunpack.c.h.b16 %v272
        %v318 = vunpack.c.l.b16 %v273
        %v319 = vunpack.c.h.b16 %v273
        %v320 = vunpack.c.l.b16 %v274
        %v321 = vunpack.c.h.b16 %v274
        %v322 = vunpack.c.l.b16 %v275
        %v323 = vunpack.c.h.b16 %v275
        %v324 = vunpack.c.l.b16 %v276
        %v325 = vunpack.c.h.b16 %v276
        %v326 = vunpack.c.l.b16 %v277
        %v327 = vunpack.c.h.b16 %v277
        %v328 = vunpack.c.l.b16 %v278
        %v329 = vunpack.c.h.b16 %v278
        %v330 = vunpack.c.l.b16 %v279
        %v331 = vunpack.c.h.b16 %v279
        %v332 = vunpack.c.l.b16 %v280
        %v333 = vunpack.c.h.b16 %v280
        %v334 = vunpack.c.l.b16 %v281
        %v335 = vunpack.c.h.b16 %v281
        %v336 = vunpack.c.l.b16 %v282
        %v337 = vunpack.c.h.b16 %v282
        %v338 = vunpack.c.l.b16 %v283
        %v339 = vunpack.c.h.b16 %v283
        %v340 = vunpack.c.l.b16 %v284
        %v341 = vunpack.c.h.b16 %v284
        %v342 = vunpack.c.l.b16 %v285
        %v343 = vunpack.c.h.b16 %v285
        %v344 = vunpack.c.l.b16 %v286
        %v345 = vunpack.c.h.b16 %v286
        %v346 = vunpack.c.l.b16 %v287
        %v347 = vunpack.c.h.b16 %v287
        %v348 = vpack.c.b16 %v318, %v316
        %v349 = vpack.c.b16 %v319, %v317
        %v350 = vpack.c.b16 %v322, %v320
        %v351 = vpack.c.b16 %v323, %v321
        %v352 = vpack.c.b16 %v326, %v324
        %v353 = vpack.c.b16 %v327, %v325
        %v354 = vpack.c.b16 %v330, %v328
        %v355 = vpack.c.b16 %v331, %v329
        %v356 = vpack.c.b16 %v334, %v332
        %v357 = vpack.c.b16 %v335, %v333
        %v358 = vpack.c.b16 %v338, %v336
        %v359 = vpack.c.b16 %v339, %v337
        %v360 = vpack.c.b16 %v342, %v340
        %v361 = vpack.c.b16 %v343, %v341
        %v362 = vpack.c.b16 %v346, %v344
        %v363 = vpack.c.b16 %v347, %v345
        %380 = vmatprep.subr.bf16.mxu0 %v363
        %381 = vmatpush1.bf16.msra.mxu0 %v362
        %382 = vmatprep.subr.bf16.mxu0 %v361
        %383 = vmatpush1.bf16.msra.mxu0 %v360
        %384 = vmatprep.subr.bf16.mxu0 %v359
        %385 = vmatpush1.bf16.msra.mxu0 %v358
        %386 = vmatprep.subr.bf16.mxu0 %v357
        %387 = vmatpush1.bf16.msra.mxu0 %v356
        %388 = vmatprep.subr.bf16.mxu0 %v355
        %389 = vmatpush1.bf16.msra.mxu0 %v354
        %390 = vmatprep.subr.bf16.mxu0 %v353
        %391 = vmatpush1.bf16.msra.mxu0 %v352
        %392 = vmatprep.subr.bf16.mxu0 %v351
        %393 = vmatpush1.bf16.msra.mxu0 %v350
        %394 = vmatprep.subr.bf16.mxu0 %v349
        %395 = vmatpush1.bf16.msra.mxu0 %v348
        %396 = vmatprep.subr.bf16.mxu0 0
        %397 = vmatpush2.bf16.msra.mxu0 0
        %398 = vmatprep.subr.bf16.mxu0 0
        %399 = vmatpush2.bf16.msra.mxu0 0
        %400 = vmatprep.subr.bf16.mxu0 0
        %401 = vmatpush2.bf16.msra.mxu0 0
        %402 = vmatprep.subr.bf16.mxu0 0
        %403 = vmatpush2.bf16.msra.mxu0 0
        %404 = vmatprep.subr.bf16.mxu0 0
        %405 = vmatpush2.bf16.msra.mxu0 0
        %406 = vmatprep.subr.bf16.mxu0 0
        %407 = vmatpush2.bf16.msra.mxu0 0
        %408 = vmatprep.subr.bf16.mxu0 0
        %409 = vmatpush2.bf16.msra.mxu0 0
        %410 = vmatprep.subr.bf16.mxu0 0
        %411 = vmatpush2.bf16.msra.mxu0 0
        %412 = vmatprep.mubr.bf16.mxu0 0
        %413 = vmatmul.mubr.bf16.gmra.mxu0 %v271
        %v414 = vpop.f32.mrf.mxu0
        %v415 = vadd.f32 %v293, %v414
        %v416 = vpop.f32.mrf.mxu0
        %v417 = vadd.f32 %v297, %v416
        %v418 = vpop.f32.mrf.mxu0
        %v419 = vpop.f32.mrf.mxu0
        %420 = vdwg.mxu0
        %v421 = vxor.u32 %v415, 2147483648
        %v422 = vxor.u32 %v417, 2147483648
        %v423 = vmul.f32 %v421, 1.442695
        %v424 = vpow.pop %v423
        %v425 = vmul.f32 %v422, 1.442695
        %v426 = vpow.pop %v425
        %v427 = vadd.f32 %v424, 1.0
        %v428 = vadd.f32 %v426, 1.0
        %v429 = vrcp.pop %v427
        %v430 = vmul.f32 1.0, %v429
        %v431 = vrcp.pop %v428
        %v432 = vmul.f32 1.0, %v431
        %v433 = vmul.f32 %v415, %v430
        %v434 = vmul.f32 %v417, %v432
        %v435 = vpack.c.bf16 %v433, %v433
        %v436 = vpack.c.bf16 %v434, %v434
        %v437 = vld [vmem:[#allocation7] sm:$0xf]
        %v438 = vld [vmem:[#allocation7 + $0x4] sm:$0xf]
        %v439 = vld [vmem:[#allocation7 + $0x8] sm:$0xf]
        %v440 = vld [vmem:[#allocation7 + $0xc] sm:$0xf]
        %v441 = vld [vmem:[#allocation7 + $0x10] sm:$0xf]
        %v442 = vld [vmem:[#allocation7 + $0x14] sm:$0xf]
        %v443 = vld [vmem:[#allocation7 + $0x18] sm:$0xf]
        %v444 = vld [vmem:[#allocation7 + $0x1c] sm:$0xf]
        %v445 = vld [vmem:[#allocation7 + $0x20] sm:$0xf]
        %v446 = vld [vmem:[#allocation7 + $0x24] sm:$0xf]
        %v447 = vld [vmem:[#allocation7 + $0x28] sm:$0xf]
        %v448 = vld [vmem:[#allocation7 + $0x2c] sm:$0xf]
        %v449 = vld [vmem:[#allocation7 + $0x30] sm:$0xf]
        %v450 = vld [vmem:[#allocation7 + $0x34] sm:$0xf]
        %v451 = vld [vmem:[#allocation7 + $0x38] sm:$0xf]
        %v452 = vld [vmem:[#allocation7 + $0x3c] sm:$0xf]
        %v453 = vld [vmem:[#allocation7 + $0x40] sm:$0xf]
        %v454 = vld [vmem:[#allocation7 + $0x44] sm:$0xf]
        %v455 = vld [vmem:[#allocation7 + $0x48] sm:$0xf]
        %v456 = vld [vmem:[#allocation7 + $0x4c] sm:$0xf]
        %v457 = vld [vmem:[#allocation7 + $0x50] sm:$0xf]
        %v458 = vld [vmem:[#allocation7 + $0x54] sm:$0xf]
        %v459 = vld [vmem:[#allocation7 + $0x58] sm:$0xf]
        %v460 = vld [vmem:[#allocation7 + $0x5c] sm:$0xf]
        %v461 = vld [vmem:[#allocation7 + $0x60] sm:$0xf]
        %v462 = vld [vmem:[#allocation7 + $0x64] sm:$0xf]
        %v463 = vld [vmem:[#allocation7 + $0x68] sm:$0xf]
        %v464 = vld [vmem:[#allocation7 + $0x6c] sm:$0xf]
        %v465 = vld [vmem:[#allocation7 + $0x70] sm:$0xf]
        %v466 = vld [vmem:[#allocation7 + $0x74] sm:$0xf]
        %v467 = vld [vmem:[#allocation7 + $0x78] sm:$0xf]
        %v468 = vld [vmem:[#allocation7 + $0x7c] sm:$0xf]
        %v469 = vld [vmem:[%s4] sm:$0x1]
        %v471 = vlaneseq
        %v472 = vshrl.u32 %v471, 7
        %v473 = vsub.s32 0, %v472
        %v474 = vrot.slane %v469, %v473
        %v508 = vunpack.c.l.b16 %v437
        %v509 = vunpack.c.l.b16 %v438
        %v510 = vunpack.c.l.b16 %v439
        %v511 = vunpack.c.l.b16 %v440
        %v512 = vunpack.c.l.b16 %v441
        %v513 = vunpack.c.l.b16 %v442
        %v514 = vunpack.c.l.b16 %v443
        %v515 = vunpack.c.l.b16 %v444
        %v516 = vunpack.c.l.b16 %v445
        %v517 = vunpack.c.l.b16 %v446
        %v518 = vunpack.c.l.b16 %v447
        %v519 = vunpack.c.l.b16 %v448
        %v520 = vunpack.c.l.b16 %v449
        %v521 = vunpack.c.l.b16 %v450
        %v522 = vunpack.c.l.b16 %v451
        %v523 = vunpack.c.l.b16 %v452
        %v524 = vunpack.c.l.b16 %v453
        %v525 = vunpack.c.l.b16 %v454
        %v526 = vunpack.c.l.b16 %v455
        %v527 = vunpack.c.l.b16 %v456
        %v528 = vunpack.c.l.b16 %v457
        %v529 = vunpack.c.l.b16 %v458
        %v530 = vunpack.c.l.b16 %v459
        %v531 = vunpack.c.l.b16 %v460
        %v532 = vunpack.c.l.b16 %v461
        %v533 = vunpack.c.l.b16 %v462
        %v534 = vunpack.c.l.b16 %v463
        %v535 = vunpack.c.l.b16 %v464
        %v536 = vunpack.c.l.b16 %v465
        %v537 = vunpack.c.l.b16 %v466
        %v538 = vunpack.c.l.b16 %v467
        %v539 = vunpack.c.l.b16 %v468
        %v540 = vpack.c.b16 %v509, %v508
        %v541 = vpack.c.b16 %v511, %v510
        %v542 = vpack.c.b16 %v513, %v512
        %v543 = vpack.c.b16 %v515, %v514
        %v544 = vpack.c.b16 %v517, %v516
        %v545 = vpack.c.b16 %v519, %v518
        %v546 = vpack.c.b16 %v521, %v520
        %v547 = vpack.c.b16 %v523, %v522
        %v548 = vpack.c.b16 %v525, %v524
        %v549 = vpack.c.b16 %v527, %v526
        %v550 = vpack.c.b16 %v529, %v528
        %v551 = vpack.c.b16 %v531, %v530
        %v552 = vpack.c.b16 %v533, %v532
        %v553 = vpack.c.b16 %v535, %v534
        %v554 = vpack.c.b16 %v537, %v536
        %v555 = vpack.c.b16 %v539, %v538
        %572 = vmatprep.subr.bf16.mxu0 0
        %573 = vmatpush1.bf16.msra.mxu0 %v547
        %574 = vmatprep.subr.bf16.mxu0 0
        %575 = vmatpush1.bf16.msra.mxu0 %v546
        %576 = vmatprep.subr.bf16.mxu0 0
        %577 = vmatpush1.bf16.msra.mxu0 %v545
        %578 = vmatprep.subr.bf16.mxu0 0
        %579 = vmatpush1.bf16.msra.mxu0 %v544
        %580 = vmatprep.subr.bf16.mxu0 0
        %581 = vmatpush1.bf16.msra.mxu0 %v543
        %582 = vmatprep.subr.bf16.mxu0 0
        %583 = vmatpush1.bf16.msra.mxu0 %v542
        %584 = vmatprep.subr.bf16.mxu0 0
        %585 = vmatpush1.bf16.msra.mxu0 %v541
        %586 = vmatprep.subr.bf16.mxu0 0
        %587 = vmatpush1.bf16.msra.mxu0 %v540
        %588 = vmatprep.subr.bf16.mxu0 0
        %589 = vmatpush2.bf16.msra.mxu0 %v555
        %590 = vmatprep.subr.bf16.mxu0 0
        %591 = vmatpush2.bf16.msra.mxu0 %v554
        %592 = vmatprep.subr.bf16.mxu0 0
        %593 = vmatpush2.bf16.msra.mxu0 %v553
        %594 = vmatprep.subr.bf16.mxu0 0
        %595 = vmatpush2.bf16.msra.mxu0 %v552
        %596 = vmatprep.subr.bf16.mxu0 0
        %597 = vmatpush2.bf16.msra.mxu0 %v551
        %598 = vmatprep.subr.bf16.mxu0 0
        %599 = vmatpush2.bf16.msra.mxu0 %v550
        %600 = vmatprep.subr.bf16.mxu0 0
        %601 = vmatpush2.bf16.msra.mxu0 %v549
        %602 = vmatprep.subr.bf16.mxu0 0
        %603 = vmatpush2.bf16.msra.mxu0 %v548
        %604 = vmatprep.mubr.bf16.mxu0 %v436
        %605 = vmatmul.mubr.bf16.gmra.mxu0 %v435
        %v606 = vpop.f32.mrf.mxu0
        %v607 = vadd.f32 %v474, %v606
        %v608 = vpop.f32.mrf.mxu0
        %v609 = vpop.f32.mrf.mxu0
        %v610 = vpop.f32.mrf.mxu0
        %611 = vdwg.mxu0
        %612 = vst [vmem:[%s268] sm:$0xff] %v607
        %s613 = sand.u32 %s141, 1
        %s614 = scalar_lea.sflag [#allocation4], %s613
        %s615 = sand.u32 %s141, 1
        %s616 = smul.addr %s615, 8
        %s617 = scalar_lea.vmem [#allocation8], %s616
        // Predicated region
        $region53: #{tpu_custom_call.1} parent=39 // pred_check
          %p618 = pneg %p151
        $region54: #{tpu_custom_call.1} parent=39 // pred_check_branch
          %620 = sbr.rel (%p618) target = $region56
        $region55: #{tpu_custom_call.1} parent=39 // pred_region
          %s622 = ssub.s32 128, 128
          %623 = vsyncadd %s614, %s622
          %s624 = smul.addr %s23, 128
          %s625 = scalar_lea.hbm %s5, %s624
          %s627 = sshll.u32 %s617, 4
          %s628 = int_to_ptr.vmem [resolvable:$true] %s627
          %630 = dma.vmem_to_hbm [thread:$0]  %s628, 128, %s625, %s614
        $region56: #{tpu_custom_call.1} parent=39 // pred_fallthru
          _
      $region40: #{tpu_custom_call.1} parent=5 // pred_fallthru
        _
      %p631 = scmp.le.s32.totalorder 2, %s18
      // Predicated region
      $region57: #{tpu_custom_call.1} parent=5 // pred_check
        %p632 = pneg %p631
      $region58: #{tpu_custom_call.1} parent=5 // pred_check_branch
        %634 = sbr.rel (%p632) target = $region60
      $region59: #{tpu_custom_call.1} parent=5 // pred_region
        %s635 = ssub.s32 %s18, 2
        // Predicated region
        $region61: #{tpu_custom_call.1} parent=59 // pred_check
          %p636 = pneg %p157
        $region62: #{tpu_custom_call.1} parent=59 // pred_check_branch
          %638 = sbr.rel (%p636) target = $region64
        $region63: #{tpu_custom_call.1} parent=59 // pred_region
          %s639 = sand.u32 %s142, 1
          %s640 = scalar_lea.sflag [#allocation4], %s639
          %s641 = sand.u32 %s142, 1
          %s642 = smul.addr %s641, 8
          %s643 = scalar_lea.vmem [#allocation8], %s642
          %644 = dma.done %s640, 128
        $region64: #{tpu_custom_call.1} parent=59 // pred_fallthru
          _
      $region60: #{tpu_custom_call.1} parent=5 // pred_fallthru
        _
    $region6: #{tpu_custom_call.1} parent=1 // loop_footer
      %s22 = sadd.s32 1, %s18
    $region7: #{tpu_custom_call.1} parent=1 // loop_footer_branch
      %17 = sbr.rel target = $region3
    $region8: #{tpu_custom_call.1} parent=1 // loop_exit
      _
    %645 = vsyncpa [#allocation3], 1
    %s646 = scalar_lea.sflag [#allocation3], 1
    %647 = vsyncpa %s646, 1
    %648 = vsyncpa [#allocation6], 1
    %649 = vsyncpa [#allocation4], 1
    %s650 = scalar_lea.sflag [#allocation4], 1
    %651 = vsyncpa %s650, 1

</llo_original>
